<compile_context>
chip_gen: v7x
topology: tpu7x:2x2x1
jax: 0.10.0
libtpu: 0.0.40
codegen_flags: <defaults>
</compile_context>

<pallas_src>
import functools

import jax
import jax.numpy as jnp
import numpy as np
from jax.experimental import pallas as pl
from jax.experimental.pallas import tpu as pltpu


def _round_up(x, m):
    return ((x + m - 1) // m) * m


def fm_kernel(idx_ref, table_ref, out_ref, *, emb_dim):
    """idx_ref:   VMEM [F, TN]           int32 -- indices, samples on the lane axis
       table_ref: VMEM [ROWS_pad, V_pad] bf16  -- rows 0:D = table^T, row D = ||row||^2
       out_ref:   VMEM [1, TN]           f32   -- lane-dense per-sample FM interaction
    """
    F, TN = idx_ref.shape
    _, V_pad = table_ref.shape

    # Multi-hot counts^T[v, n] = #{ f : idx[n, f] == v }, accumulated as int32 masks and
    # cast to the matmul dtype once (values <= F are exact in bf16).  Out-of-range
    # indices (>= V_pad) would be silently dropped here rather than erroring like
    # nn.Embedding (not reachable with the given data).
    iota_v = jax.lax.broadcasted_iota(jnp.int32, (V_pad, TN), 0)
    counts = jnp.zeros((V_pad, TN), jnp.int32)
    for f in range(F):  # F is tiny and static
        counts = counts + (iota_v == idx_ref[f:f + 1, :]).astype(jnp.int32)

    # One fused bf16 MXU pass: [ROWS_pad, V_pad] @ [V_pad, TN] -> f32 [ROWS_pad, TN].
    fused = jnp.dot(table_ref[...], counts.astype(jnp.bfloat16),
                    preferred_element_type=jnp.float32)
    sum_v = fused[:emb_dim, :]                    # sum_f e_f          per sample
    sum_sq = fused[emb_dim:emb_dim + 1, :]        # sum_f ||e_f||^2    per sample

    # Sublane (XLU) reduction over D -> (1, TN), written lane-dense.
    out_ref[...] = jnp.sum(sum_v * sum_v, axis=0, keepdims=True) - sum_sq


def prepare_fm_table(table):
    """One-time weight prep (NOT per call): build the fused, padded, transposed bf16
    table [ROWS_pad, V_pad] with rows 0:D = table^T and row D = per-row squared norm
    (squared-norm computed in f32 before the bf16 cast)."""
    V, D = table.shape
    V_pad = _round_up(V, 128)
    rows_pad = _round_up(D + 1, 8)

    table_f32 = table.astype(jnp.float32)
    row_sq_sum = jnp.sum(table_f32 * table_f32, axis=1, keepdims=True)     # [V, 1]
    aug = jnp.concatenate([table_f32, row_sq_sum], axis=1)                 # [V, D+1]
    aug = jnp.pad(aug, ((0, V_pad - V), (0, rows_pad - (D + 1))))          # zero rows/cols
    return aug.T.astype(jnp.bfloat16)                                      # [ROWS_pad, V_pad]


def factorization_machine(x_idx, table_t, emb_dim, *, tile_n=256):
    """x_idx: [N, F] int indices; table_t: output of prepare_fm_table; emb_dim: D.
    Returns [N] float32."""
    N, F = x_idx.shape
    rows_pad, V_pad = table_t.shape

    TN = tile_n
    N_pad = _round_up(N, TN)

    # Indices padded along the batch (pad rows point at row 0; their outputs are sliced
    # off) and transposed so each kernel tile reads a lane-dense (F, TN) block.
    x_pad = jnp.pad(x_idx.astype(jnp.int32), ((0, N_pad - N), (0, 0)))     # [N_pad, F]
    x_t = x_pad.T                                                          # [F, N_pad]

    grid = (N_pad // TN,)
    out = pl.pallas_call(
        functools.partial(fm_kernel, emb_dim=emb_dim),
        out_shape=jax.ShapeDtypeStruct((1, N_pad), jnp.float32),
        grid_spec=pltpu.PrefetchScalarGridSpec(
            num_scalar_prefetch=0,
            grid=grid,
            in_specs=[
                # Per-tile index block: samples on lanes.
                pl.BlockSpec((F, TN), lambda i: (0, i)),
                # Fused table, constant index_map -> stays VMEM-resident across grid.
                pl.BlockSpec((rows_pad, V_pad), lambda i: (0, 0)),
            ],
            out_specs=pl.BlockSpec((1, TN), lambda i: (0, i)),
        ),
        compiler_params=pltpu.CompilerParams(
            # Independent batch tiles: lets v7x's two TensorCores split the grid.
            dimension_semantics=("parallel",),
            # Headroom for larger TN / V (scoped default is only 16 MiB on v5e).
            vmem_limit_bytes=32 * 1024 * 1024,
        ),
    )(x_t, table_t)

    return out[0, :N]


def fm_reference(x_idx, table):
    emb = jnp.take(table, x_idx, axis=0)                       # [N, F, D]
    square_of_sum = jnp.sum(emb, axis=1) ** 2                  # [N, D]
    sum_of_square = jnp.sum(emb ** 2, axis=1)                  # [N, D]
    return jnp.sum(square_of_sum - sum_of_square, axis=1)      # [N]


if __name__ == "__main__":
    # Module config: field_features -> total vocab V = sum(field_features), vector_dim D.
    field_features = (10, 20, 30, 40)
    V = sum(field_features)      # 100
    D = 32
    N = 2                        # batch
    F = len(field_features)      # feat_num = 4

    key = jax.random.PRNGKey(0)
    k_tbl, k_idx = jax.random.split(key)

    # nn.Embedding default init: N(0, 1).
    table = jax.random.normal(k_tbl, (V, D), dtype=jnp.float32)
    # Integer feature indices into the concatenated embedding table.
    x_idx = jax.random.randint(k_idx, (N, F), 0, V, dtype=jnp.int32)

    table_t = prepare_fm_table(table)        # one-time weight prep (constant w.r.t. batch)
    out = factorization_machine(x_idx, table_t, D)
    out = jax.block_until_ready(out)

    ref = fm_reference(x_idx, table)
    # Tolerance loosened vs. the pure-f32 path: the table feeds the MXU in bf16.
    np.testing.assert_allclose(np.asarray(out), np.asarray(ref), rtol=3e-2, atol=1.0)

    print("KERNEL_OK")
</pallas_src>

<mosaic_0001>
module attributes {stable_mosaic.version = 11 : i64} {
  func.func @fm_kernel(%arg0: i32, %arg1: memref<4x256xi32, #tpu.memory_space<vmem>>, %arg2: memref<40x128xbf16, #tpu.memory_space<vmem>>, %arg3: memref<1x256xf32, #tpu.memory_space<vmem>>) attributes {dimension_semantics = [#tpu.dimension_semantics<parallel>], iteration_bounds = array<i64: 1>, scalar_prefetch = 0 : i64, scratch_operands = 0 : i64, tpu.core_type = #tpu.core_type<tc>, window_params = [{transform_indices = @transform_0, window_bounds = array<i64: 4, 256>}, {pipeline_mode = #tpu.pipeline_mode<synchronous>, transform_indices = @transform_1, window_bounds = array<i64: 40, 128>}, {transform_indices = @transform_2, window_bounds = array<i64: 1, 256>}]} {
    %0 = tpu.iota {dimensions = array<i32: 0>} : vector<128x256xi32>
    %c0_i32 = arith.constant 0 : i32
    %1 = vector.broadcast %c0_i32 : i32 to vector<128x256xi32>
    %c0 = arith.constant 0 : index
    %c0_0 = arith.constant 0 : index
    %2 = vector.load %arg1[%c0, %c0_0] : memref<4x256xi32, #tpu.memory_space<vmem>>, vector<1x256xi32>
    %3 = vector.broadcast %2 : vector<1x256xi32> to vector<128x256xi32>
    %4 = arith.cmpi eq, %0, %3 : vector<128x256xi32>
    %5 = arith.extui %4 : vector<128x256xi1> to vector<128x256xi32>
    %6 = arith.addi %1, %5 : vector<128x256xi32>
    %c1 = arith.constant 1 : index
    %c0_1 = arith.constant 0 : index
    %7 = vector.load %arg1[%c1, %c0_1] : memref<4x256xi32, #tpu.memory_space<vmem>>, vector<1x256xi32>
    %8 = vector.broadcast %7 : vector<1x256xi32> to vector<128x256xi32>
    %9 = arith.cmpi eq, %0, %8 : vector<128x256xi32>
    %10 = arith.extui %9 : vector<128x256xi1> to vector<128x256xi32>
    %11 = arith.addi %6, %10 : vector<128x256xi32>
    %c2 = arith.constant 2 : index
    %c0_2 = arith.constant 0 : index
    %12 = vector.load %arg1[%c2, %c0_2] : memref<4x256xi32, #tpu.memory_space<vmem>>, vector<1x256xi32>
    %13 = vector.broadcast %12 : vector<1x256xi32> to vector<128x256xi32>
    %14 = arith.cmpi eq, %0, %13 : vector<128x256xi32>
    %15 = arith.extui %14 : vector<128x256xi1> to vector<128x256xi32>
    %16 = arith.addi %11, %15 : vector<128x256xi32>
    %c3 = arith.constant 3 : index
    %c0_3 = arith.constant 0 : index
    %17 = vector.load %arg1[%c3, %c0_3] : memref<4x256xi32, #tpu.memory_space<vmem>>, vector<1x256xi32>
    %18 = vector.broadcast %17 : vector<1x256xi32> to vector<128x256xi32>
    %19 = arith.cmpi eq, %0, %18 : vector<128x256xi32>
    %20 = arith.extui %19 : vector<128x256xi1> to vector<128x256xi32>
    %21 = arith.addi %16, %20 : vector<128x256xi32>
    %c0_4 = arith.constant 0 : index
    %c0_5 = arith.constant 0 : index
    %22 = vector.load %arg2[%c0_4, %c0_5] : memref<40x128xbf16, #tpu.memory_space<vmem>>, vector<40x128xbf16>
    %23 = arith.sitofp %21 : vector<128x256xi32> to vector<128x256xbf16>
    %cst = arith.constant dense<0.000000e+00> : vector<40x256xf32>
    %24 = tpu.matmul %22, %23, %cst {dimension_numbers = #tpu.dot_dimension_numbers<[1], [0], [0], [1], [0, 0, 1, 1], [], []>} : vector<40x128xbf16>, vector<128x256xbf16>, vector<40x256xf32> -> vector<40x256xf32>
    %25 = vector.extract_strided_slice %24 {offsets = [0, 0], sizes = [32, 256], strides = [1, 1]} : vector<40x256xf32> to vector<32x256xf32>
    %26 = vector.extract_strided_slice %24 {offsets = [32, 0], sizes = [1, 256], strides = [1, 1]} : vector<40x256xf32> to vector<1x256xf32>
    %27 = arith.mulf %25, %25 : vector<32x256xf32>
    %cst_6 = arith.constant dense<0.000000e+00> : vector<256xf32>
    %28 = vector.multi_reduction <add>, %27, %cst_6 [0] : vector<32x256xf32> to vector<256xf32>
    %29 = vector.shape_cast %28 : vector<256xf32> to vector<1x256xf32>
    %30 = arith.subf %29, %26 : vector<1x256xf32>
    %c0_7 = arith.constant 0 : index
    %c0_8 = arith.constant 0 : index
    %31 = vector.load %arg3[%c0_7, %c0_8] : memref<1x256xf32, #tpu.memory_space<vmem>>, vector<1x256xf32>
    tpu.vector_store %arg3[%c0_7, %c0_8], %30 {strides = array<i32>} : memref<1x256xf32, #tpu.memory_space<vmem>>, vector<1x256xf32>,
    return
  }
  func.func @transform_0(%arg0: i32) -> (i32, i32) {
    %c0_i32 = arith.constant 0 : i32
    %c0_i32_0 = arith.constant 0 : i32
    return %c0_i32, %arg0 : i32, i32
  }
  func.func @transform_1(%arg0: i32) -> (i32, i32) {
    %c0_i32 = arith.constant 0 : i32
    %c0_i32_0 = arith.constant 0 : i32
    %c0_i32_1 = arith.constant 0 : i32
    return %c0_i32, %c0_i32_0 : i32, i32
  }
  func.func @transform_2(%arg0: i32) -> (i32, i32) {
    %c0_i32 = arith.constant 0 : i32
    %c0_i32_0 = arith.constant 0 : i32
    return %c0_i32, %arg0 : i32, i32
  }
}

</mosaic_0001>

<llo_original>
// kernel: tpu_custom_call.1
$region0: #{tpu_custom_call.1}
  #allocation0 [shape = 'u32[]', space=smem, size = 0x4, offset = 0x4, fixed_abs, tag = 'smem constant byte address 0x4 - core index']
  #allocation1 [shape = 'u32[144,128]{1,0:T(1,128)}', space=vmem, size = 0x12000, scoped, tag = 'internal scratch']
  %s0 = inlined_call_operand.hbm [shape: s32[4,256], index: 0, kind: input, shape index: {}]
  %s1 = inlined_call_operand.hbm [shape: bf16[40,128], index: 1, kind: input, shape index: {}]
  %s2 = inlined_call_operand.hbm [shape: f32[1,256], index: 2, kind: output, shape index: {}]
  %s3 = sld [smem:[#allocation0]]
  $region26: #{tpu_custom_call.1} parent=0
    _
  %s5 = ssub.s32 1, %s3
  %s6 = scalar_select 0, %s5, %s3
  $region1: #{tpu_custom_call.1} parent=0
    #allocation2 [shape = 'u8[4096]{0}', space=vmem, size = 0x1000, scoped, tag = 'input window, operand 0, single buffered']
    #allocation3 [shape = 's32[1]{0}', space=sflag, size = 0x4, scoped, tag = 'scoped memory for tpu_custom_call.1']
    #allocation4 [shape = 's32[1]{0}', space=sflag, size = 0x4, scoped, tag = 'scoped memory for tpu_custom_call.1']
    #allocation5 [shape = 'u8[10240]{0}', space=vmem, size = 0x2800, scoped, tag = 'input window, operand 1, single buffered']
    #allocation6 [shape = 's32[1]{0}', space=sflag, size = 0x4, scoped, tag = 'scoped memory for tpu_custom_call.1']
    #allocation7 [shape = 'u8[1024]{0}', space=vmem, size = 0x400, scoped, tag = 'output window, operand 0, single buffered']
    %7 = vsyncpa [#allocation3], 0
    %8 = vsyncpa [#allocation6], 0
    %9 = vsyncpa [#allocation4], 0
    // Predicated region
    $region2: #{tpu_custom_call.1} parent=1 // pred_check
      _
    $region3: #{tpu_custom_call.1} parent=1 // pred_check_branch
      %11 = sbr.rel (0) target = $region5
    $region4: #{tpu_custom_call.1} parent=1 // pred_region
      %s13 = ssub.s32 128, 128
      %14 = vsyncadd [#allocation3], %s13
      %s16 = sshll.u32 [#allocation2], 4
      %s17 = int_to_ptr.vmem [resolvable:$true] %s16
      %19 = dma.hbm_to_vmem [thread:$0]  %s0, 128, %s17, [#allocation3]
    $region5: #{tpu_custom_call.1} parent=1 // pred_fallthru
      _
    // Predicated region
    $region6: #{tpu_custom_call.1} parent=1 // pred_check
      _
    $region7: #{tpu_custom_call.1} parent=1 // pred_check_branch
      %21 = sbr.rel (0) target = $region9
    $region8: #{tpu_custom_call.1} parent=1 // pred_region
      %s23 = ssub.s32 320, 320
      %24 = vsyncadd [#allocation6], %s23
      %s25 = sshll.u32 [#allocation5], 4
      %s26 = int_to_ptr.vmem [resolvable:$true] %s25
      %31 = dma.hbm_to_vmem [thread:$0]  %s1, 320, %s26, [#allocation6], 64, 64, 4
    $region9: #{tpu_custom_call.1} parent=1 // pred_fallthru
      _
    // Predicated region
    $region10: #{tpu_custom_call.1} parent=1 // pred_check
      _
    $region11: #{tpu_custom_call.1} parent=1 // pred_check_branch
      %33 = sbr.rel (0) target = $region13
    $region12: #{tpu_custom_call.1} parent=1 // pred_region
      %34 = dma.done [#allocation3], 128
    $region13: #{tpu_custom_call.1} parent=1 // pred_fallthru
      _
    // Predicated region
    $region14: #{tpu_custom_call.1} parent=1 // pred_check
      _
    $region15: #{tpu_custom_call.1} parent=1 // pred_check_branch
      %36 = sbr.rel (0) target = $region17
    $region16: #{tpu_custom_call.1} parent=1 // pred_region
      %37 = dma.done [#allocation6], 320
    $region17: #{tpu_custom_call.1} parent=1 // pred_fallthru
      _
    %v39 = vlaneseq
    %v40 = vshrl.u32 %v39, 7
    %v41 = vadd.s32 %v40, 8
    %v42 = vadd.s32 %v40, 16
    %v43 = vadd.s32 %v40, 24
    %v44 = vadd.s32 %v40, 32
    %v45 = vadd.s32 %v40, 40
    %v46 = vadd.s32 %v40, 48
    %v47 = vadd.s32 %v40, 56
    %v48 = vadd.s32 %v40, 64
    %v49 = vadd.s32 %v40, 72
    %v50 = vadd.s32 %v40, 80
    %v51 = vadd.s32 %v40, 88
    %v52 = vadd.s32 %v40, 96
    %v53 = vadd.s32 %v40, 104
    %v54 = vadd.s32 %v40, 112
    %v55 = vadd.s32 %v40, 120
    %v56 = vld [vmem:[#allocation2] ss:$4 sm:$0x3]
    %v57 = vlaneseq
    %v58 = vshrl.u32 %v57, 7
    %v59 = vsub.s32 0, %v58
    %v60 = vrot.slane %v56, %v59
    %v61 = vlaneseq
    %v62 = vshrl.u32 %v61, 7
    %v63 = vsub.s32 1, %v62
    %v64 = vrot.slane %v56, %v63
    %vm65 = vcmp.eq.s32.totalorder %v40, %v60
    %vm66 = vcmp.eq.s32.totalorder %v40, %v64
    %vm67 = vcmp.eq.s32.totalorder %v41, %v60
    %vm68 = vcmp.eq.s32.totalorder %v41, %v64
    %vm69 = vcmp.eq.s32.totalorder %v42, %v60
    %vm70 = vcmp.eq.s32.totalorder %v42, %v64
    %vm71 = vcmp.eq.s32.totalorder %v43, %v60
    %vm72 = vcmp.eq.s32.totalorder %v43, %v64
    %vm73 = vcmp.eq.s32.totalorder %v44, %v60
    %vm74 = vcmp.eq.s32.totalorder %v44, %v64
    %vm75 = vcmp.eq.s32.totalorder %v45, %v60
    %vm76 = vcmp.eq.s32.totalorder %v45, %v64
    %vm77 = vcmp.eq.s32.totalorder %v46, %v60
    %vm78 = vcmp.eq.s32.totalorder %v46, %v64
    %vm79 = vcmp.eq.s32.totalorder %v47, %v60
    %vm80 = vcmp.eq.s32.totalorder %v47, %v64
    %vm81 = vcmp.eq.s32.totalorder %v48, %v60
    %vm82 = vcmp.eq.s32.totalorder %v48, %v64
    %vm83 = vcmp.eq.s32.totalorder %v49, %v60
    %vm84 = vcmp.eq.s32.totalorder %v49, %v64
    %vm85 = vcmp.eq.s32.totalorder %v50, %v60
    %vm86 = vcmp.eq.s32.totalorder %v50, %v64
    %vm87 = vcmp.eq.s32.totalorder %v51, %v60
    %vm88 = vcmp.eq.s32.totalorder %v51, %v64
    %vm89 = vcmp.eq.s32.totalorder %v52, %v60
    %vm90 = vcmp.eq.s32.totalorder %v52, %v64
    %vm91 = vcmp.eq.s32.totalorder %v53, %v60
    %vm92 = vcmp.eq.s32.totalorder %v53, %v64
    %vm93 = vcmp.eq.s32.totalorder %v54, %v60
    %vm94 = vcmp.eq.s32.totalorder %v54, %v64
    %vm95 = vcmp.eq.s32.totalorder %v55, %v60
    %vm96 = vcmp.eq.s32.totalorder %v55, %v64
    %v97 = vsel %vm65, 1, 0
    %v98 = vsel %vm66, 1, 0
    %v99 = vsel %vm67, 1, 0
    %v100 = vsel %vm68, 1, 0
    %v101 = vsel %vm69, 1, 0
    %v102 = vsel %vm70, 1, 0
    %v103 = vsel %vm71, 1, 0
    %v104 = vsel %vm72, 1, 0
    %v105 = vsel %vm73, 1, 0
    %v106 = vsel %vm74, 1, 0
    %v107 = vsel %vm75, 1, 0
    %v108 = vsel %vm76, 1, 0
    %v109 = vsel %vm77, 1, 0
    %v110 = vsel %vm78, 1, 0
    %v111 = vsel %vm79, 1, 0
    %v112 = vsel %vm80, 1, 0
    %v113 = vsel %vm81, 1, 0
    %v114 = vsel %vm82, 1, 0
    %v115 = vsel %vm83, 1, 0
    %v116 = vsel %vm84, 1, 0
    %v117 = vsel %vm85, 1, 0
    %v118 = vsel %vm86, 1, 0
    %v119 = vsel %vm87, 1, 0
    %v120 = vsel %vm88, 1, 0
    %v121 = vsel %vm89, 1, 0
    %v122 = vsel %vm90, 1, 0
    %v123 = vsel %vm91, 1, 0
    %v124 = vsel %vm92, 1, 0
    %v125 = vsel %vm93, 1, 0
    %v126 = vsel %vm94, 1, 0
    %v127 = vsel %vm95, 1, 0
    %v128 = vsel %vm96, 1, 0
    %s129 = scalar_lea.vmem [#allocation2], 1
    %v130 = vld [vmem:[%s129] ss:$4 sm:$0x3]
    %v131 = vlaneseq
    %v132 = vshrl.u32 %v131, 7
    %v133 = vsub.s32 0, %v132
    %v134 = vrot.slane %v130, %v133
    %v135 = vlaneseq
    %v136 = vshrl.u32 %v135, 7
    %v137 = vsub.s32 1, %v136
    %v138 = vrot.slane %v130, %v137
    %vm139 = vcmp.eq.s32.totalorder %v40, %v134
    %vm140 = vcmp.eq.s32.totalorder %v40, %v138
    %vm141 = vcmp.eq.s32.totalorder %v41, %v134
    %vm142 = vcmp.eq.s32.totalorder %v41, %v138
    %vm143 = vcmp.eq.s32.totalorder %v42, %v134
    %vm144 = vcmp.eq.s32.totalorder %v42, %v138
    %vm145 = vcmp.eq.s32.totalorder %v43, %v134
    %vm146 = vcmp.eq.s32.totalorder %v43, %v138
    %vm147 = vcmp.eq.s32.totalorder %v44, %v134
    %vm148 = vcmp.eq.s32.totalorder %v44, %v138
    %vm149 = vcmp.eq.s32.totalorder %v45, %v134
    %vm150 = vcmp.eq.s32.totalorder %v45, %v138
    %vm151 = vcmp.eq.s32.totalorder %v46, %v134
    %vm152 = vcmp.eq.s32.totalorder %v46, %v138
    %vm153 = vcmp.eq.s32.totalorder %v47, %v134
    %vm154 = vcmp.eq.s32.totalorder %v47, %v138
    %vm155 = vcmp.eq.s32.totalorder %v48, %v134
    %vm156 = vcmp.eq.s32.totalorder %v48, %v138
    %vm157 = vcmp.eq.s32.totalorder %v49, %v134
    %vm158 = vcmp.eq.s32.totalorder %v49, %v138
    %vm159 = vcmp.eq.s32.totalorder %v50, %v134
    %vm160 = vcmp.eq.s32.totalorder %v50, %v138
    %vm161 = vcmp.eq.s32.totalorder %v51, %v134
    %vm162 = vcmp.eq.s32.totalorder %v51, %v138
    %vm163 = vcmp.eq.s32.totalorder %v52, %v134
    %vm164 = vcmp.eq.s32.totalorder %v52, %v138
    %vm165 = vcmp.eq.s32.totalorder %v53, %v134
    %vm166 = vcmp.eq.s32.totalorder %v53, %v138
    %vm167 = vcmp.eq.s32.totalorder %v54, %v134
    %vm168 = vcmp.eq.s32.totalorder %v54, %v138
    %vm169 = vcmp.eq.s32.totalorder %v55, %v134
    %vm170 = vcmp.eq.s32.totalorder %v55, %v138
    %v171 = vsel %vm139, 1, 0
    %v172 = vsel %vm140, 1, 0
    %v173 = vsel %vm141, 1, 0
    %v174 = vsel %vm142, 1, 0
    %v175 = vsel %vm143, 1, 0
    %v176 = vsel %vm144, 1, 0
    %v177 = vsel %vm145, 1, 0
    %v178 = vsel %vm146, 1, 0
    %v179 = vsel %vm147, 1, 0
    %v180 = vsel %vm148, 1, 0
    %v181 = vsel %vm149, 1, 0
    %v182 = vsel %vm150, 1, 0
    %v183 = vsel %vm151, 1, 0
    %v184 = vsel %vm152, 1, 0
    %v185 = vsel %vm153, 1, 0
    %v186 = vsel %vm154, 1, 0
    %v187 = vsel %vm155, 1, 0
    %v188 = vsel %vm156, 1, 0
    %v189 = vsel %vm157, 1, 0
    %v190 = vsel %vm158, 1, 0
    %v191 = vsel %vm159, 1, 0
    %v192 = vsel %vm160, 1, 0
    %v193 = vsel %vm161, 1, 0
    %v194 = vsel %vm162, 1, 0
    %v195 = vsel %vm163, 1, 0
    %v196 = vsel %vm164, 1, 0
    %v197 = vsel %vm165, 1, 0
    %v198 = vsel %vm166, 1, 0
    %v199 = vsel %vm167, 1, 0
    %v200 = vsel %vm168, 1, 0
    %v201 = vsel %vm169, 1, 0
    %v202 = vsel %vm170, 1, 0
    %v203 = vadd.s32 %v97, %v171
    %v204 = vadd.s32 %v98, %v172
    %v205 = vadd.s32 %v99, %v173
    %v206 = vadd.s32 %v100, %v174
    %v207 = vadd.s32 %v101, %v175
    %v208 = vadd.s32 %v102, %v176
    %v209 = vadd.s32 %v103, %v177
    %v210 = vadd.s32 %v104, %v178
    %v211 = vadd.s32 %v105, %v179
    %v212 = vadd.s32 %v106, %v180
    %v213 = vadd.s32 %v107, %v181
    %v214 = vadd.s32 %v108, %v182
    %v215 = vadd.s32 %v109, %v183
    %v216 = vadd.s32 %v110, %v184
    %v217 = vadd.s32 %v111, %v185
    %v218 = vadd.s32 %v112, %v186
    %v219 = vadd.s32 %v113, %v187
    %v220 = vadd.s32 %v114, %v188
    %v221 = vadd.s32 %v115, %v189
    %v222 = vadd.s32 %v116, %v190
    %v223 = vadd.s32 %v117, %v191
    %v224 = vadd.s32 %v118, %v192
    %v225 = vadd.s32 %v119, %v193
    %v226 = vadd.s32 %v120, %v194
    %v227 = vadd.s32 %v121, %v195
    %v228 = vadd.s32 %v122, %v196
    %v229 = vadd.s32 %v123, %v197
    %v230 = vadd.s32 %v124, %v198
    %v231 = vadd.s32 %v125, %v199
    %v232 = vadd.s32 %v126, %v200
    %v233 = vadd.s32 %v127, %v201
    %v234 = vadd.s32 %v128, %v202
    %s235 = scalar_lea.vmem [#allocation2], 2
    %v236 = vld [vmem:[%s235] ss:$4 sm:$0x3]
    %v237 = vlaneseq
    %v238 = vshrl.u32 %v237, 7
    %v239 = vsub.s32 0, %v238
    %v240 = vrot.slane %v236, %v239
    %v241 = vlaneseq
    %v242 = vshrl.u32 %v241, 7
    %v243 = vsub.s32 1, %v242
    %v244 = vrot.slane %v236, %v243
    %vm245 = vcmp.eq.s32.totalorder %v40, %v240
    %vm246 = vcmp.eq.s32.totalorder %v40, %v244
    %vm247 = vcmp.eq.s32.totalorder %v41, %v240
    %vm248 = vcmp.eq.s32.totalorder %v41, %v244
    %vm249 = vcmp.eq.s32.totalorder %v42, %v240
    %vm250 = vcmp.eq.s32.totalorder %v42, %v244
    %vm251 = vcmp.eq.s32.totalorder %v43, %v240
    %vm252 = vcmp.eq.s32.totalorder %v43, %v244
    %vm253 = vcmp.eq.s32.totalorder %v44, %v240
    %vm254 = vcmp.eq.s32.totalorder %v44, %v244
    %vm255 = vcmp.eq.s32.totalorder %v45, %v240
    %vm256 = vcmp.eq.s32.totalorder %v45, %v244
    %vm257 = vcmp.eq.s32.totalorder %v46, %v240
    %vm258 = vcmp.eq.s32.totalorder %v46, %v244
    %vm259 = vcmp.eq.s32.totalorder %v47, %v240
    %vm260 = vcmp.eq.s32.totalorder %v47, %v244
    %vm261 = vcmp.eq.s32.totalorder %v48, %v240
    %vm262 = vcmp.eq.s32.totalorder %v48, %v244
    %vm263 = vcmp.eq.s32.totalorder %v49, %v240
    %vm264 = vcmp.eq.s32.totalorder %v49, %v244
    %vm265 = vcmp.eq.s32.totalorder %v50, %v240
    %vm266 = vcmp.eq.s32.totalorder %v50, %v244
    %vm267 = vcmp.eq.s32.totalorder %v51, %v240
    %vm268 = vcmp.eq.s32.totalorder %v51, %v244
    %vm269 = vcmp.eq.s32.totalorder %v52, %v240
    %vm270 = vcmp.eq.s32.totalorder %v52, %v244
    %vm271 = vcmp.eq.s32.totalorder %v53, %v240
    %vm272 = vcmp.eq.s32.totalorder %v53, %v244
    %vm273 = vcmp.eq.s32.totalorder %v54, %v240
    %vm274 = vcmp.eq.s32.totalorder %v54, %v244
    %vm275 = vcmp.eq.s32.totalorder %v55, %v240
    %vm276 = vcmp.eq.s32.totalorder %v55, %v244
    %v277 = vsel %vm245, 1, 0
    %v278 = vsel %vm246, 1, 0
    %v279 = vsel %vm247, 1, 0
    %v280 = vsel %vm248, 1, 0
    %v281 = vsel %vm249, 1, 0
    %v282 = vsel %vm250, 1, 0
    %v283 = vsel %vm251, 1, 0
    %v284 = vsel %vm252, 1, 0
    %v285 = vsel %vm253, 1, 0
    %v286 = vsel %vm254, 1, 0
    %v287 = vsel %vm255, 1, 0
    %v288 = vsel %vm256, 1, 0
    %v289 = vsel %vm257, 1, 0
    %v290 = vsel %vm258, 1, 0
    %v291 = vsel %vm259, 1, 0
    %v292 = vsel %vm260, 1, 0
    %v293 = vsel %vm261, 1, 0
    %v294 = vsel %vm262, 1, 0
    %v295 = vsel %vm263, 1, 0
    %v296 = vsel %vm264, 1, 0
    %v297 = vsel %vm265, 1, 0
    %v298 = vsel %vm266, 1, 0
    %v299 = vsel %vm267, 1, 0
    %v300 = vsel %vm268, 1, 0
    %v301 = vsel %vm269, 1, 0
    %v302 = vsel %vm270, 1, 0
    %v303 = vsel %vm271, 1, 0
    %v304 = vsel %vm272, 1, 0
    %v305 = vsel %vm273, 1, 0
    %v306 = vsel %vm274, 1, 0
    %v307 = vsel %vm275, 1, 0
    %v308 = vsel %vm276, 1, 0
    %v309 = vadd.s32 %v203, %v277
    %v310 = vadd.s32 %v204, %v278
    %v311 = vadd.s32 %v205, %v279
    %v312 = vadd.s32 %v206, %v280
    %v313 = vadd.s32 %v207, %v281
    %v314 = vadd.s32 %v208, %v282
    %v315 = vadd.s32 %v209, %v283
    %v316 = vadd.s32 %v210, %v284
    %v317 = vadd.s32 %v211, %v285
    %v318 = vadd.s32 %v212, %v286
    %v319 = vadd.s32 %v213, %v287
    %v320 = vadd.s32 %v214, %v288
    %v321 = vadd.s32 %v215, %v289
    %v322 = vadd.s32 %v216, %v290
    %v323 = vadd.s32 %v217, %v291
    %v324 = vadd.s32 %v218, %v292
    %v325 = vadd.s32 %v219, %v293
    %v326 = vadd.s32 %v220, %v294
    %v327 = vadd.s32 %v221, %v295
    %v328 = vadd.s32 %v222, %v296
    %v329 = vadd.s32 %v223, %v297
    %v330 = vadd.s32 %v224, %v298
    %v331 = vadd.s32 %v225, %v299
    %v332 = vadd.s32 %v226, %v300
    %v333 = vadd.s32 %v227, %v301
    %v334 = vadd.s32 %v228, %v302
    %v335 = vadd.s32 %v229, %v303
    %v336 = vadd.s32 %v230, %v304
    %v337 = vadd.s32 %v231, %v305
    %v338 = vadd.s32 %v232, %v306
    %v339 = vadd.s32 %v233, %v307
    %v340 = vadd.s32 %v234, %v308
    %s341 = scalar_lea.vmem [#allocation2], 3
    %v342 = vld [vmem:[%s341] ss:$4 sm:$0x3]
    %v343 = vlaneseq
    %v344 = vshrl.u32 %v343, 7
    %v345 = vsub.s32 0, %v344
    %v346 = vrot.slane %v342, %v345
    %v347 = vlaneseq
    %v348 = vshrl.u32 %v347, 7
    %v349 = vsub.s32 1, %v348
    %v350 = vrot.slane %v342, %v349
    %vm351 = vcmp.eq.s32.totalorder %v40, %v346
    %vm352 = vcmp.eq.s32.totalorder %v40, %v350
    %vm353 = vcmp.eq.s32.totalorder %v41, %v346
    %vm354 = vcmp.eq.s32.totalorder %v41, %v350
    %vm355 = vcmp.eq.s32.totalorder %v42, %v346
    %vm356 = vcmp.eq.s32.totalorder %v42, %v350
    %vm357 = vcmp.eq.s32.totalorder %v43, %v346
    %vm358 = vcmp.eq.s32.totalorder %v43, %v350
    %vm359 = vcmp.eq.s32.totalorder %v44, %v346
    %vm360 = vcmp.eq.s32.totalorder %v44, %v350
    %vm361 = vcmp.eq.s32.totalorder %v45, %v346
    %vm362 = vcmp.eq.s32.totalorder %v45, %v350
    %vm363 = vcmp.eq.s32.totalorder %v46, %v346
    %vm364 = vcmp.eq.s32.totalorder %v46, %v350
    %vm365 = vcmp.eq.s32.totalorder %v47, %v346
    %vm366 = vcmp.eq.s32.totalorder %v47, %v350
    %vm367 = vcmp.eq.s32.totalorder %v48, %v346
    %vm368 = vcmp.eq.s32.totalorder %v48, %v350
    %vm369 = vcmp.eq.s32.totalorder %v49, %v346
    %vm370 = vcmp.eq.s32.totalorder %v49, %v350
    %vm371 = vcmp.eq.s32.totalorder %v50, %v346
    %vm372 = vcmp.eq.s32.totalorder %v50, %v350
    %vm373 = vcmp.eq.s32.totalorder %v51, %v346
    %vm374 = vcmp.eq.s32.totalorder %v51, %v350
    %vm375 = vcmp.eq.s32.totalorder %v52, %v346
    %vm376 = vcmp.eq.s32.totalorder %v52, %v350
    %vm377 = vcmp.eq.s32.totalorder %v53, %v346
    %vm378 = vcmp.eq.s32.totalorder %v53, %v350
    %vm379 = vcmp.eq.s32.totalorder %v54, %v346
    %vm380 = vcmp.eq.s32.totalorder %v54, %v350
    %vm381 = vcmp.eq.s32.totalorder %v55, %v346
    %vm382 = vcmp.eq.s32.totalorder %v55, %v350
    %v383 = vsel %vm351, 1, 0
    %v384 = vsel %vm352, 1, 0
    %v385 = vsel %vm353, 1, 0
    %v386 = vsel %vm354, 1, 0
    %v387 = vsel %vm355, 1, 0
    %v388 = vsel %vm356, 1, 0
    %v389 = vsel %vm357, 1, 0
    %v390 = vsel %vm358, 1, 0
    %v391 = vsel %vm359, 1, 0
    %v392 = vsel %vm360, 1, 0
    %v393 = vsel %vm361, 1, 0
    %v394 = vsel %vm362, 1, 0
    %v395 = vsel %vm363, 1, 0
    %v396 = vsel %vm364, 1, 0
    %v397 = vsel %vm365, 1, 0
    %v398 = vsel %vm366, 1, 0
    %v399 = vsel %vm367, 1, 0
    %v400 = vsel %vm368, 1, 0
    %v401 = vsel %vm369, 1, 0
    %v402 = vsel %vm370, 1, 0
    %v403 = vsel %vm371, 1, 0
    %v404 = vsel %vm372, 1, 0
    %v405 = vsel %vm373, 1, 0
    %v406 = vsel %vm374, 1, 0
    %v407 = vsel %vm375, 1, 0
    %v408 = vsel %vm376, 1, 0
    %v409 = vsel %vm377, 1, 0
    %v410 = vsel %vm378, 1, 0
    %v411 = vsel %vm379, 1, 0
    %v412 = vsel %vm380, 1, 0
    %v413 = vsel %vm381, 1, 0
    %v414 = vsel %vm382, 1, 0
    %v415 = vadd.s32 %v309, %v383
    %v416 = vadd.s32 %v310, %v384
    %v417 = vadd.s32 %v311, %v385
    %v418 = vadd.s32 %v312, %v386
    %v419 = vadd.s32 %v313, %v387
    %v420 = vadd.s32 %v314, %v388
    %v421 = vadd.s32 %v315, %v389
    %v422 = vadd.s32 %v316, %v390
    %v423 = vadd.s32 %v317, %v391
    %v424 = vadd.s32 %v318, %v392
    %v425 = vadd.s32 %v319, %v393
    %v426 = vadd.s32 %v320, %v394
    %v427 = vadd.s32 %v321, %v395
    %v428 = vadd.s32 %v322, %v396
    %v429 = vadd.s32 %v323, %v397
    %v430 = vadd.s32 %v324, %v398
    %v431 = vadd.s32 %v325, %v399
    %v432 = vadd.s32 %v326, %v400
    %v433 = vadd.s32 %v327, %v401
    %v434 = vadd.s32 %v328, %v402
    %v435 = vadd.s32 %v329, %v403
    %v436 = vadd.s32 %v330, %v404
    %v437 = vadd.s32 %v331, %v405
    %v438 = vadd.s32 %v332, %v406
    %v439 = vadd.s32 %v333, %v407
    %v440 = vadd.s32 %v334, %v408
    %v441 = vadd.s32 %v335, %v409
    %v442 = vadd.s32 %v336, %v410
    %v443 = vadd.s32 %v337, %v411
    %v444 = vadd.s32 %v338, %v412
    %v445 = vadd.s32 %v339, %v413
    %v446 = vadd.s32 %v340, %v414
    %v447 = vld [vmem:[#allocation5] sm:$0xf]
    %v448 = vld [vmem:[#allocation5 + $0x4] sm:$0xf]
    %v449 = vld [vmem:[#allocation5 + $0x8] sm:$0xf]
    %v450 = vld [vmem:[#allocation5 + $0xc] sm:$0xf]
    %v451 = vld [vmem:[#allocation5 + $0x10] sm:$0xf]
    %v452 = vcvt.s32.f32 %v415
    %v453 = vcvt.s32.f32 %v416
    %v454 = vcvt.s32.f32 %v417
    %v455 = vcvt.s32.f32 %v418
    %v456 = vcvt.s32.f32 %v419
    %v457 = vcvt.s32.f32 %v420
    %v458 = vcvt.s32.f32 %v421
    %v459 = vcvt.s32.f32 %v422
    %v460 = vcvt.s32.f32 %v423
    %v461 = vcvt.s32.f32 %v424
    %v462 = vcvt.s32.f32 %v425
    %v463 = vcvt.s32.f32 %v426
    %v464 = vcvt.s32.f32 %v427
    %v465 = vcvt.s32.f32 %v428
    %v466 = vcvt.s32.f32 %v429
    %v467 = vcvt.s32.f32 %v430
    %v468 = vcvt.s32.f32 %v431
    %v469 = vcvt.s32.f32 %v432
    %v470 = vcvt.s32.f32 %v433
    %v471 = vcvt.s32.f32 %v434
    %v472 = vcvt.s32.f32 %v435
    %v473 = vcvt.s32.f32 %v436
    %v474 = vcvt.s32.f32 %v437
    %v475 = vcvt.s32.f32 %v438
    %v476 = vcvt.s32.f32 %v439
    %v477 = vcvt.s32.f32 %v440
    %v478 = vcvt.s32.f32 %v441
    %v479 = vcvt.s32.f32 %v442
    %v480 = vcvt.s32.f32 %v443
    %v481 = vcvt.s32.f32 %v444
    %v482 = vcvt.s32.f32 %v445
    %v483 = vcvt.s32.f32 %v446
    %v484 = vpack.c.bf16 %v454, %v452
    %v485 = vpack.c.bf16 %v455, %v453
    %v486 = vpack.c.bf16 %v458, %v456
    %v487 = vpack.c.bf16 %v459, %v457
    %v488 = vpack.c.bf16 %v462, %v460
    %v489 = vpack.c.bf16 %v463, %v461
    %v490 = vpack.c.bf16 %v466, %v464
    %v491 = vpack.c.bf16 %v467, %v465
    %v492 = vpack.c.bf16 %v470, %v468
    %v493 = vpack.c.bf16 %v471, %v469
    %v494 = vpack.c.bf16 %v474, %v472
    %v495 = vpack.c.bf16 %v475, %v473
    %v496 = vpack.c.bf16 %v478, %v476
    %v497 = vpack.c.bf16 %v479, %v477
    %v498 = vpack.c.bf16 %v482, %v480
    %v499 = vpack.c.bf16 %v483, %v481
    %v505 = vunpack.c.l.b16 %v447
    %v506 = vunpack.c.l.b16 %v448
    %v507 = vunpack.c.l.b16 %v449
    %v508 = vunpack.c.l.b16 %v450
    %v509 = vunpack.c.l.b16 %v451
    %v510 = vpack.c.b16 %v506, %v505
    %v511 = vpack.c.b16 %v508, %v507
    %v512 = vpack.c.b16 %v509, %v509
    %516 = vmatprep.subr.bf16.mxu0 %v485
    %517 = vmatpush1.bf16.msra.mxu0 %v484
    %518 = vmatprep.subr.bf16.mxu0 %v487
    %519 = vmatpush1.bf16.msra.mxu0 %v486
    %520 = vmatprep.subr.bf16.mxu0 %v489
    %521 = vmatpush1.bf16.msra.mxu0 %v488
    %522 = vmatprep.subr.bf16.mxu0 %v491
    %523 = vmatpush1.bf16.msra.mxu0 %v490
    %524 = vmatprep.subr.bf16.mxu0 %v493
    %525 = vmatpush1.bf16.msra.mxu0 %v492
    %526 = vmatprep.subr.bf16.mxu0 %v495
    %527 = vmatpush1.bf16.msra.mxu0 %v494
    %528 = vmatprep.subr.bf16.mxu0 %v497
    %529 = vmatpush1.bf16.msra.mxu0 %v496
    %530 = vmatprep.subr.bf16.mxu0 %v499
    %531 = vmatpush1.bf16.msra.mxu0 %v498
    %532 = vmatprep.subr.bf16.mxu0 0
    %533 = vmatpush1.bf16.msra.mxu0 0
    %534 = vmatprep.subr.bf16.mxu0 0
    %535 = vmatpush1.bf16.msra.mxu0 0
    %536 = vmatprep.subr.bf16.mxu0 0
    %537 = vmatpush1.bf16.msra.mxu0 0
    %538 = vmatprep.subr.bf16.mxu0 0
    %539 = vmatpush1.bf16.msra.mxu0 0
    %540 = vmatprep.subr.bf16.mxu0 0
    %541 = vmatpush1.bf16.msra.mxu0 0
    %542 = vmatprep.subr.bf16.mxu0 0
    %543 = vmatpush1.bf16.msra.mxu0 0
    %544 = vmatprep.subr.bf16.mxu0 0
    %545 = vmatpush1.bf16.msra.mxu0 0
    %546 = vmatprep.subr.bf16.mxu0 0
    %547 = vmatpush1.bf16.msra.mxu0 0
    %548 = vmatprep.mubr.bf16.mxu0 0
    %549 = vmatmul.mubr.bf16.gmra.mrb[0].mxu0 %v510
    %v550 = vpop.f32.mrb[0].mxu0
    %v551 = vadd.f32 0.0, %v550
    %v552 = vpop.f32.mrb[0].mxu0
    %v553 = vadd.f32 0.0, %v552
    %v554 = vpop.f32.mrb[0].mxu0
    %v555 = vadd.f32 0.0, %v554
    %v556 = vpop.f32.mrb[0].mxu0
    %v557 = vadd.f32 0.0, %v556
    %558 = vmatprep.mubr.bf16.mxu0 0
    %559 = vmatmul.mubr.bf16.gmra.mrb[0].mxu0 %v511
    %v560 = vpop.f32.mrb[0].mxu0
    %v561 = vadd.f32 0.0, %v560
    %v562 = vpop.f32.mrb[0].mxu0
    %v563 = vadd.f32 0.0, %v562
    %v564 = vpop.f32.mrb[0].mxu0
    %v565 = vadd.f32 0.0, %v564
    %v566 = vpop.f32.mrb[0].mxu0
    %v567 = vadd.f32 0.0, %v566
    %568 = vmatprep.mubr.bf16.mxu0 0
    %569 = vmatmul.mubr.bf16.gmra.mrb[0].mxu0 %v512
    %v570 = vpop.f32.mrb[0].mxu0
    %v571 = vadd.f32 0.0, %v570
    %v572 = vpop.f32.mrb[0].mxu0
    %v573 = vadd.f32 0.0, %v572
    %v574 = vpop.f32.mrb[0].mxu0
    %v575 = vpop.f32.mrb[0].mxu0
    %576 = vdwg.mxu0
    %v577 = vmul.f32 %v551, %v551
    %v578 = vmul.f32 %v553, %v553
    %v579 = vmul.f32 %v555, %v555
    %v580 = vmul.f32 %v557, %v557
    %v581 = vmul.f32 %v561, %v561
    %v582 = vmul.f32 %v563, %v563
    %v583 = vmul.f32 %v565, %v565
    %v584 = vmul.f32 %v567, %v567
    %v585 = vadd.f32 %v577, %v579
    %v586 = vadd.f32 %v585, %v581
    %v587 = vadd.f32 %v586, %v583
    %v588 = vrot.slane %v587, 4
    %v589 = vadd.f32 %v587, %v588
    %v590 = vrot.slane %v589, 2
    %v591 = vadd.f32 %v589, %v590
    %v592 = vrot.slane %v591, 1
    %v593 = vadd.f32 %v591, %v592
    %v594 = vadd.f32 %v578, %v580
    %v595 = vadd.f32 %v594, %v582
    %v596 = vadd.f32 %v595, %v584
    %v597 = vrot.slane %v596, 4
    %v598 = vadd.f32 %v596, %v597
    %v599 = vrot.slane %v598, 2
    %v600 = vadd.f32 %v598, %v599
    %v601 = vrot.slane %v600, 1
    %v602 = vadd.f32 %v600, %v601
    %v603 = vsub.f32 %v593, %v571
    %v604 = vsub.f32 %v602, %v573
    %v607 = vcombine.low %v603, %v604
    %v609 = vunpack.c.l.s4 1966171168
    %v610 = vunpack.c.0.s8 %v609
    %v611 = vlaneseq
    %v612 = vshrl.u32 %v611, 7
    %v613 = vsub.s32 %v610, %v612
    %v614 = vrot.slane %v607, %v613
    %v616 = vunpack.c.l.s4 1966171168
    %v617 = vunpack.c.0.s8 %v616
    %v618 = vlaneseq
    %v619 = vshrl.u32 %v618, 7
    %v620 = vsub.s32 %v617, %v619
    %v621 = vrot.slane %v614, %v620
    %v623 = vlaneseq
    %vm624 = vcmp.ge.s32.totalorder %v623, 0
    %vm625 = vcmp.lt.s32.totalorder %v623, 256
    %vm626 = vmand %vm624, %vm625
    %627 = vst.msk [vmem:[#allocation7] sm:$0x3] %vm626, %v621
    // Predicated region
    $region18: #{tpu_custom_call.1} parent=1 // pred_check
      _
    $region19: #{tpu_custom_call.1} parent=1 // pred_check_branch
      %629 = sbr.rel (0) target = $region21
    $region20: #{tpu_custom_call.1} parent=1 // pred_region
      %s631 = ssub.s32 32, 32
      %632 = vsyncadd [#allocation4], %s631
      %s634 = sshll.u32 [#allocation7], 4
      %s635 = int_to_ptr.vmem [resolvable:$true] %s634
      %637 = dma.vmem_to_hbm [thread:$0]  %s635, 32, %s2, [#allocation4]
    $region21: #{tpu_custom_call.1} parent=1 // pred_fallthru
      _
    // Predicated region
    $region22: #{tpu_custom_call.1} parent=1 // pred_check
      _
    $region23: #{tpu_custom_call.1} parent=1 // pred_check_branch
      %639 = sbr.rel (0) target = $region25
    $region24: #{tpu_custom_call.1} parent=1 // pred_region
      %640 = dma.done [#allocation4], 32
    $region25: #{tpu_custom_call.1} parent=1 // pred_fallthru
      _
    %641 = vsyncpa [#allocation3], 1
    %642 = vsyncpa [#allocation6], 1
    %643 = vsyncpa [#allocation4], 1

</llo_original>
